<compile_context>
chip_gen: v6e
topology: v6e:2x2x1
jax: 0.10.0
libtpu: 0.0.40
codegen_flags: <defaults>
</compile_context>

<pallas_src>
import jax
import jax.numpy as jnp
from jax.experimental import pallas as pl
from jax.experimental.pallas import tpu as pltpu


LANE = 512                      # lane-dense last dim (multiple of 128)
TARGET_BLOCK_BYTES = 2 << 20    # ~2 MiB per X block (6x in flight ≈ 12 MiB)


def _mixup_x_kernel(perm_ref, coeffs_ref,   # scalar-prefetch (SMEM)
                    x_ref, xp_ref,          # inputs  (VMEM blocks)
                    xo_ref):                # output  (VMEM block)
    b = pl.program_id(0)
    c = coeffs_ref[b]                       # scalar read from SMEM
    # out = c * X[b] + (1 - c) * X[perm[b]]   (compute in f32, store in X dtype)
    xo_ref[...] = (c * x_ref[...].astype(jnp.float32)
                   + (1.0 - c) * xp_ref[...].astype(jnp.float32)
                   ).astype(xo_ref.dtype)


def mixup_pallas(X, Y, perm, coeffs, *, mixadd=False):
    """X: (bs, ...) float, Y: (bs, ...) float, perm: (bs,) i32, coeffs: (bs,) f32."""
    bs = X.shape[0]
    orig_shape = X.shape
    n_feat = 1
    for d in X.shape[1:]:
        n_feat *= d

    perm = perm.astype(jnp.int32)
    coeffs = coeffs.astype(jnp.float32)

    # ---- lane-dense layout: (bs, rows, LANE), rows tiled into ~2 MiB blocks ----
    lane = LANE
    pad_flat = (-n_feat) % lane
    rows = (n_feat + pad_flat) // lane

    itemsize = jnp.dtype(X.dtype).itemsize
    tile_r = max(1, TARGET_BLOCK_BYTES // (lane * itemsize))
    if rows <= tile_r:
        # One block spans the whole (short) row axis; block dim == full array dim.
        tile_r = rows
        pad_rows = 0
    else:
        tile_r = max(8, (tile_r // 8) * 8)        # sublane multiple
        pad_rows = (-rows) % tile_r

    Xf = X.reshape(bs, n_feat)
    if pad_flat:
        Xf = jnp.pad(Xf, ((0, 0), (0, pad_flat)))
    X3 = Xf.reshape(bs, rows, lane)
    if pad_rows:
        X3 = jnp.pad(X3, ((0, 0), (0, pad_rows), (0, 0)))
        rows += pad_rows

    n_row_tiles = rows // tile_r

    x_map = lambda b, r, perm, coeffs: (b, r, 0)
    xp_map = lambda b, r, perm, coeffs: (perm[b], r, 0)

    grid_spec = pltpu.PrefetchScalarGridSpec(
        num_scalar_prefetch=2,
        grid=(bs, n_row_tiles),
        in_specs=[
            pl.BlockSpec((1, tile_r, lane), x_map),
            pl.BlockSpec((1, tile_r, lane), xp_map),
        ],
        out_specs=pl.BlockSpec((1, tile_r, lane), x_map),
    )

    # NOTE: do NOT alias the output onto X — later grid steps read X[perm[b]]
    # which an in-place write could have clobbered (WAR hazard).
    Xo3 = pl.pallas_call(
        _mixup_x_kernel,
        out_shape=jax.ShapeDtypeStruct((bs, rows, lane), X.dtype),
        grid_spec=grid_spec,
        compiler_params=pltpu.CompilerParams(
            dimension_semantics=("parallel", "arbitrary"),
            vmem_limit_bytes=32 * 1024 * 1024,
        ),
    )(perm, coeffs, X3, X3)

    Xo = Xo3.reshape(bs, rows * lane)[:, :n_feat].reshape(orig_shape)

    # ---- Y mix: tiny (a few KB) — plain JAX, matches the PyTorch branches ----
    if mixadd:
        Yo = jnp.clip(Y + Y[perm], 0.0, 1.0)
    else:
        c_y = coeffs.reshape((-1,) + (1,) * (Y.ndim - 1)).astype(Y.dtype)
        Yo = c_y * Y + (1.0 - c_y) * Y[perm]

    return Xo, Yo


def mixup_ref(X, Y, perm, coeffs, *, mixadd=False):
    """Pure-JAX reference matching the PyTorch forward (N-D X, N-D Y)."""
    c_x = coeffs.reshape((-1,) + (1,) * (X.ndim - 1))
    Xo = c_x * X + (1.0 - c_x) * X[perm]
    if mixadd:
        Yo = jnp.clip(Y + Y[perm], 0.0, 1.0)
    else:
        c_y = coeffs.reshape((-1,) + (1,) * (Y.ndim - 1))
        Yo = c_y * Y + (1.0 - c_y) * Y[perm]
    return Xo, Yo


if __name__ == "__main__":
    key = jax.random.PRNGKey(0)
    k_x, k_y, k_perm, k_beta = jax.random.split(key, 4)

    bs, C, H, W = 2, 4, 16, 16
    K = 8               # number of target classes
    mix_beta = 1.0      # Mixup(mix_beta=1.0, mixadd=False)
    mixadd = False

    X = jax.random.normal(k_x, (bs, C, H, W), dtype=jnp.float32)
    Y = jax.random.uniform(k_y, (bs, K), dtype=jnp.float32)

    # Deterministic "randperm" and Beta(mix_beta, mix_beta) coefficients (glue).
    perm = jax.random.permutation(k_perm, bs).astype(jnp.int32)
    coeffs = jax.random.beta(k_beta, mix_beta, mix_beta, (bs,)).astype(jnp.float32)

    Xo, Yo = mixup_pallas(X, Y, perm, coeffs, mixadd=mixadd)
    jax.block_until_ready((Xo, Yo))

    Xr, Yr = mixup_ref(X, Y, perm, coeffs, mixadd=mixadd)
    assert jnp.allclose(Xo, Xr, atol=1e-6), "X mixup mismatch"
    assert jnp.allclose(Yo, Yr, atol=1e-6), "Y mixup mismatch"

    # Exercise the mixadd branch too (Y path is plain JAX, but keep it honest).
    Xo2, Yo2 = mixup_pallas(X, Y, perm, coeffs, mixadd=True)
    Xr2, Yr2 = mixup_ref(X, Y, perm, coeffs, mixadd=True)
    jax.block_until_ready((Xo2, Yo2))
    assert jnp.allclose(Xo2, Xr2, atol=1e-6)
    assert jnp.allclose(Yo2, Yr2, atol=1e-6)

    print("KERNEL_OK")
</pallas_src>

<mosaic_0001>
module attributes {stable_mosaic.version = 11 : i64} {
  func.func @_mixup_x_kernel(%arg0: i32, %arg1: i32, %arg2: memref<2xi32, #tpu.memory_space<smem>>, %arg3: memref<2xf32, #tpu.memory_space<smem>>, %arg4: memref<1x2x512xf32, #tpu.memory_space<vmem>>, %arg5: memref<1x2x512xf32, #tpu.memory_space<vmem>>, %arg6: memref<1x2x512xf32, #tpu.memory_space<vmem>>) attributes {dimension_semantics = [#tpu.dimension_semantics<parallel>, #tpu.dimension_semantics<arbitrary>], iteration_bounds = array<i64: 2, 1>, scalar_prefetch = 2 : i64, scratch_operands = 0 : i64, tpu.core_type = #tpu.core_type<tc>, window_params = [{transform_indices = @transform_0, window_bounds = array<i64: 1, 2, 512>}, {transform_indices = @transform_1, window_bounds = array<i64: 1, 2, 512>}, {transform_indices = @transform_2, window_bounds = array<i64: 1, 2, 512>}]} {
    %0 = arith.index_cast %arg0 : i32 to index
    %1 = memref.load %arg3[%0] : memref<2xf32, #tpu.memory_space<smem>>
    %c0 = arith.constant 0 : index
    %c0_0 = arith.constant 0 : index
    %c0_1 = arith.constant 0 : index
    %2 = vector.load %arg4[%c0, %c0_0, %c0_1] : memref<1x2x512xf32, #tpu.memory_space<vmem>>, vector<1x2x512xf32>
    %3 = vector.broadcast %1 : f32 to vector<1x2x512xf32>
    %4 = arith.mulf %3, %2 : vector<1x2x512xf32>
    %cst = arith.constant 1.000000e+00 : f32
    %5 = arith.subf %cst, %1 : f32
    %c0_2 = arith.constant 0 : index
    %c0_3 = arith.constant 0 : index
    %c0_4 = arith.constant 0 : index
    %6 = vector.load %arg5[%c0_2, %c0_3, %c0_4] : memref<1x2x512xf32, #tpu.memory_space<vmem>>, vector<1x2x512xf32>
    %7 = vector.broadcast %5 : f32 to vector<1x2x512xf32>
    %8 = arith.mulf %7, %6 : vector<1x2x512xf32>
    %9 = arith.addf %4, %8 : vector<1x2x512xf32>
    %c0_5 = arith.constant 0 : index
    %c0_6 = arith.constant 0 : index
    %c0_7 = arith.constant 0 : index
    %10 = vector.load %arg6[%c0_5, %c0_6, %c0_7] : memref<1x2x512xf32, #tpu.memory_space<vmem>>, vector<1x2x512xf32>
    tpu.vector_store %arg6[%c0_5, %c0_6, %c0_7], %9 {strides = array<i32>} : memref<1x2x512xf32, #tpu.memory_space<vmem>>, vector<1x2x512xf32>,
    return
  }
  func.func @transform_0(%arg0: i32, %arg1: i32, %arg2: memref<2xi32, #tpu.memory_space<smem>>, %arg3: memref<2xf32, #tpu.memory_space<smem>>) -> (i32, i32, i32) {
    %c0_i32 = arith.constant 0 : i32
    %c0_i32_0 = arith.constant 0 : i32
    return %arg0, %arg1, %c0_i32 : i32, i32, i32
  }
  func.func @transform_1(%arg0: i32, %arg1: i32, %arg2: memref<2xi32, #tpu.memory_space<smem>>, %arg3: memref<2xf32, #tpu.memory_space<smem>>) -> (i32, i32, i32) {
    %0 = arith.index_cast %arg0 : i32 to index
    %1 = memref.load %arg2[%0] : memref<2xi32, #tpu.memory_space<smem>>
    %c0_i32 = arith.constant 0 : i32
    %c0_i32_0 = arith.constant 0 : i32
    return %1, %arg1, %c0_i32 : i32, i32, i32
  }
  func.func @transform_2(%arg0: i32, %arg1: i32, %arg2: memref<2xi32, #tpu.memory_space<smem>>, %arg3: memref<2xf32, #tpu.memory_space<smem>>) -> (i32, i32, i32) {
    %c0_i32 = arith.constant 0 : i32
    %c0_i32_0 = arith.constant 0 : i32
    return %arg0, %arg1, %c0_i32 : i32, i32, i32
  }
}

</mosaic_0001>

<llo_original>
// kernel: tpu_custom_call.1
$region0: #{tpu_custom_call.1}
  #allocation0 [shape = 'u32[]', space=smem, size = 0x4, offset = 0x4, fixed_abs, tag = 'smem constant byte address 0x4 - core index']
  #allocation1 [shape = 'u32[144,128]{1,0:T(1,128)}', space=vmem, size = 0x12000, scoped, tag = 'internal scratch']
  #allocation2 [shape = 's32[1]{0}', space=sflag, size = 0x4, scoped, tag = 'scoped memory for tpu_custom_call.1']
  #allocation3 [shape = 'u8[512]{0}', space=smem, size = 0x200, scoped, tag = 'prefetched SMEM operand 0']
  #allocation4 [shape = 'u8[512]{0}', space=smem, size = 0x200, scoped, tag = 'prefetched SMEM operand 1']
  %s0 = inlined_call_operand.hbm [shape: s32[2], index: 0, kind: input, shape index: {}]
  %s1 = inlined_call_operand.vmem [shape: f32[2], index: 1, kind: input, shape index: {}]
  %s2 = inlined_call_operand.hbm [shape: f32[2,2,512], index: 2, kind: input, shape index: {}]
  %s3 = inlined_call_operand.hbm [shape: f32[2,2,512], index: 3, kind: input, shape index: {}]
  %s4 = inlined_call_operand.hbm [shape: f32[2,2,512], index: 4, kind: output, shape index: {}]
  %s5 = sld [smem:[#allocation0]]
  $region49: #{tpu_custom_call.1} parent=0
    _
  %s7 = ssub.s32 1, %s5
  %s8 = scalar_select 0, %s7, %s5
  %10 = dma.hbm_to_smem %s0, 16, [#allocation3], [#allocation2]
  %s11 = sshll.u32 %s1, 4
  %s12 = int_to_ptr.vmem [resolvable:$true] %s11
  %14 = dma.vmem_to_smem %s12, 16, [#allocation4], [#allocation2]
  %15 = dma.done [#allocation2], 32
  %16 = sfence
  $region1: #{tpu_custom_call.1} parent=0
    #allocation5 [shape = 'u8[8192]{0}', space=vmem, size = 0x2000, scoped, tag = 'input window, operand 2']
    #allocation6 [shape = 's32[2]{0}', space=sflag, size = 0x8, scoped, tag = 'scoped memory for tpu_custom_call.1']
    #allocation7 [shape = 's32[2]{0}', space=sflag, size = 0x8, scoped, tag = 'scoped memory for tpu_custom_call.1']
    #allocation8 [shape = 'u8[8192]{0}', space=vmem, size = 0x2000, scoped, tag = 'input window, operand 3']
    #allocation9 [shape = 's32[2]{0}', space=sflag, size = 0x8, scoped, tag = 'scoped memory for tpu_custom_call.1']
    #allocation10 [shape = 'u8[8192]{0}', space=vmem, size = 0x2000, scoped, tag = 'output window, operand 0']
    %17 = vsyncpa [#allocation6], 0
    %s18 = scalar_lea.sflag [#allocation6], 1
    %19 = vsyncpa %s18, 0
    %20 = vsyncpa [#allocation9], 0
    %s21 = scalar_lea.sflag [#allocation9], 1
    %22 = vsyncpa %s21, 0
    %23 = vsyncpa [#allocation7], 0
    %s24 = scalar_lea.sflag [#allocation7], 1
    %25 = vsyncpa %s24, 0
    loop: start=0, step=1, limit=4
    $region2: #{tpu_custom_call.1} parent=1 // loop_pre_header
      _
    $region3: #{tpu_custom_call.1} parent=1 // loop_header
      %s27 = sphi 0, %s31
      %p28 = scmp.ge.s32.totalorder %s27, 4
      %s34 = sphi 0, %s46
      %s35 = sphi 0, %s42
      %s36 = sphi 0, %s34
      %s37 = sphi 0, %s35
      %s38 = sphi 0, %s36
      %s39 = sphi 0, %s37
      %s51 = sphi 0, %s53
      %s54 = sphi 0, %s51
      %s55 = sphi 0, %s54
      %s71 = sphi 0, %s55
      %s81 = sphi 0, %s83
      %s84 = sphi 0, %s81
      %s85 = sphi 0, %s84
      %s101 = sphi 0, %s85
      %s109 = sphi 0, %s111
      %s112 = sphi 0, %s109
      %s113 = sphi 0, %s112
      %s129 = sphi 0, %s113
    $region4: #{tpu_custom_call.1} parent=1 // loop_header_branch
      %30 = sbr.rel (%p28) target = $region8
    $region5: #{tpu_custom_call.1} parent=1 // loop_body
      %s32 = ssub.s32 %s27, 1
      %s33 = ssub.s32 %s27, 2
      %s40 = sadd.s32 1, %s35
      %p41 = scmp.ge.s32.totalorder %s40, 1
      %s42 = scalar_select %p41, 0, %s40
      %s43 = sadd.s32 1, %s34
      %s44 = scalar_select %p41, %s43, %s34
      %p45 = scmp.ge.s32.totalorder %s44, 2
      %s46 = scalar_select %p45, 0, %s44
      %s47 = ssub.s32 %s34, %s46
      %s48 = ssub.s32 %s35, %s42
      %s49 = sor.u32 %s47, %s48
      %p50 = scmp.eq.s32.totalorder %s49, 0
      %s52 = sadd.s32 %s51, 1
      %s53 = scalar_select %p50, %s51, %s52
      %p56 = pneg %p50
      %p57 = scmp.eq.s32.totalorder %s27, 1
      %p58 = por %p56, %p57
      %p59 = scmp.ne.s32.totalorder %s51, %s54
      %p60 = scmp.eq.s32.totalorder %s27, 0
      %p61 = por %p59, %p60
      %p62 = scmp.ne.s32.totalorder %s51, %s54
      %p63 = scmp.eq.s32.totalorder %s32, 1
      %p64 = por %p62, %p63
      %p65 = scmp.ne.s32.totalorder %s54, %s55
      %p66 = scmp.eq.s32.totalorder %s32, 0
      %p67 = por %p65, %p66
      %p68 = scmp.ne.s32.totalorder %s54, %s55
      %p69 = scmp.eq.s32.totalorder %s33, 1
      %p70 = por %p68, %p69
      %p72 = scmp.ne.s32.totalorder %s55, %s71
      %p73 = scmp.eq.s32.totalorder %s33, 0
      %p74 = por %p72, %p73
      %s75 = sld [smem:[#allocation3 + %s34]]
      %s76 = sld [smem:[#allocation3 + %s46]]
      %s77 = ssub.s32 %s75, %s76
      %s78 = ssub.s32 %s35, %s42
      %s79 = sor.u32 %s77, %s78
      %p80 = scmp.eq.s32.totalorder %s79, 0
      %s82 = sadd.s32 %s81, 1
      %s83 = scalar_select %p80, %s81, %s82
      %p86 = pneg %p80
      %p87 = scmp.eq.s32.totalorder %s27, 1
      %p88 = por %p86, %p87
      %p89 = scmp.ne.s32.totalorder %s81, %s84
      %p90 = scmp.eq.s32.totalorder %s27, 0
      %p91 = por %p89, %p90
      %p92 = scmp.ne.s32.totalorder %s81, %s84
      %p93 = scmp.eq.s32.totalorder %s32, 1
      %p94 = por %p92, %p93
      %p95 = scmp.ne.s32.totalorder %s84, %s85
      %p96 = scmp.eq.s32.totalorder %s32, 0
      %p97 = por %p95, %p96
      %p98 = scmp.ne.s32.totalorder %s84, %s85
      %p99 = scmp.eq.s32.totalorder %s33, 1
      %p100 = por %p98, %p99
      %p102 = scmp.ne.s32.totalorder %s85, %s101
      %p103 = scmp.eq.s32.totalorder %s33, 0
      %p104 = por %p102, %p103
      %s105 = ssub.s32 %s34, %s46
      %s106 = ssub.s32 %s35, %s42
      %s107 = sor.u32 %s105, %s106
      %p108 = scmp.eq.s32.totalorder %s107, 0
      %s110 = sadd.s32 %s109, 1
      %s111 = scalar_select %p108, %s109, %s110
      %p114 = pneg %p108
      %p115 = scmp.eq.s32.totalorder %s27, 1
      %p116 = por %p114, %p115
      %p117 = scmp.ne.s32.totalorder %s109, %s112
      %p118 = scmp.eq.s32.totalorder %s27, 0
      %p119 = por %p117, %p118
      %p120 = scmp.ne.s32.totalorder %s109, %s112
      %p121 = scmp.eq.s32.totalorder %s32, 1
      %p122 = por %p120, %p121
      %p123 = scmp.ne.s32.totalorder %s112, %s113
      %p124 = scmp.eq.s32.totalorder %s32, 0
      %p125 = por %p123, %p124
      %p126 = scmp.ne.s32.totalorder %s112, %s113
      %p127 = scmp.eq.s32.totalorder %s33, 1
      %p128 = por %p126, %p127
      %p130 = scmp.ne.s32.totalorder %s113, %s129
      %p131 = scmp.eq.s32.totalorder %s33, 0
      %p132 = por %p130, %p131
      %p133 = scmp.le.s32.totalorder 1, %s27
      %p134 = scmp.lt.s32.totalorder %s27, 3
      %p135 = pnand %p133, %p134
      %p136 = pneg %p135
      // Predicated region
      $region9: #{tpu_custom_call.1} parent=5 // pred_check
        _
      $region10: #{tpu_custom_call.1} parent=5 // pred_check_branch
        %138 = sbr.rel (%p135) target = $region12
      $region11: #{tpu_custom_call.1} parent=5 // pred_region
        %s139 = ssub.s32 %s27, 1
      $region12: #{tpu_custom_call.1} parent=5 // pred_fallthru
        _
      %p140 = scmp.lt.s32.totalorder %s27, 2
      // Predicated region
      $region13: #{tpu_custom_call.1} parent=5 // pred_check
        %p141 = pneg %p140
      $region14: #{tpu_custom_call.1} parent=5 // pred_check_branch
        %143 = sbr.rel (%p141) target = $region16
      $region15: #{tpu_custom_call.1} parent=5 // pred_region
        // Predicated region
        $region17: #{tpu_custom_call.1} parent=15 // pred_check
          %p144 = pneg %p61
        $region18: #{tpu_custom_call.1} parent=15 // pred_check_branch
          %146 = sbr.rel (%p144) target = $region20
        $region19: #{tpu_custom_call.1} parent=15 // pred_region
          %s147 = sand.u32 %s51, 1
          %s148 = scalar_lea.sflag [#allocation6], %s147
          %s149 = sand.u32 %s51, 1
          %s150 = smul.addr %s149, 8
          %s151 = scalar_lea.vmem [#allocation5], %s150
          %s153 = ssub.s32 128, 128
          %154 = vsyncadd %s148, %s153
          %s155 = smul.addr %s35, 4
          %s156 = smul.addr %s34, 4
          %s157 = sadd.s32 %s155, %s156
          %s158 = smul.addr %s157, 32
          %s159 = scalar_lea.hbm %s2, %s158
          %s161 = sshll.u32 %s151, 4
          %s162 = int_to_ptr.vmem [resolvable:$true] %s161
          %164 = dma.hbm_to_vmem [thread:$0]  %s159, 128, %s162, %s148
        $region20: #{tpu_custom_call.1} parent=15 // pred_fallthru
          _
        // Predicated region
        $region21: #{tpu_custom_call.1} parent=15 // pred_check
          %p165 = pneg %p91
        $region22: #{tpu_custom_call.1} parent=15 // pred_check_branch
          %167 = sbr.rel (%p165) target = $region24
        $region23: #{tpu_custom_call.1} parent=15 // pred_region
          %s168 = sand.u32 %s81, 1
          %s169 = scalar_lea.sflag [#allocation9], %s168
          %s170 = sand.u32 %s81, 1
          %s171 = smul.addr %s170, 8
          %s172 = scalar_lea.vmem [#allocation8], %s171
          %s173 = sld [smem:[#allocation3 + %s34]]
          %s175 = ssub.s32 128, 128
          %176 = vsyncadd %s169, %s175
          %s177 = smul.addr %s35, 4
          %s178 = smul.addr %s173, 4
          %s179 = sadd.s32 %s177, %s178
          %s180 = smul.addr %s179, 32
          %s181 = scalar_lea.hbm %s3, %s180
          %s183 = sshll.u32 %s172, 4
          %s184 = int_to_ptr.vmem [resolvable:$true] %s183
          %186 = dma.hbm_to_vmem [thread:$0]  %s181, 128, %s184, %s169
        $region24: #{tpu_custom_call.1} parent=15 // pred_fallthru
          _
      $region16: #{tpu_custom_call.1} parent=5 // pred_fallthru
        _
      %p187 = scmp.le.s32.totalorder 1, %s27
      %p188 = scmp.lt.s32.totalorder %s27, 3
      %p189 = pnand %p187, %p188
      %p190 = pneg %p189
      // Predicated region
      $region25: #{tpu_custom_call.1} parent=5 // pred_check
        _
      $region26: #{tpu_custom_call.1} parent=5 // pred_check_branch
        %192 = sbr.rel (%p189) target = $region28
      $region27: #{tpu_custom_call.1} parent=5 // pred_region
        %s193 = ssub.s32 %s27, 1
        %s194 = sand.u32 %s54, 1
        %s195 = scalar_lea.sflag [#allocation6], %s194
        %s196 = sand.u32 %s54, 1
        %s197 = smul.addr %s196, 8
        %s198 = scalar_lea.vmem [#allocation5], %s197
        // Predicated region
        $region29: #{tpu_custom_call.1} parent=27 // pred_check
          %p199 = pneg %p67
        $region30: #{tpu_custom_call.1} parent=27 // pred_check_branch
          %201 = sbr.rel (%p199) target = $region32
        $region31: #{tpu_custom_call.1} parent=27 // pred_region
          %202 = dma.done %s195, 128
        $region32: #{tpu_custom_call.1} parent=27 // pred_fallthru
          _
        %s203 = sand.u32 %s84, 1
        %s204 = scalar_lea.sflag [#allocation9], %s203
        %s205 = sand.u32 %s84, 1
        %s206 = smul.addr %s205, 8
        %s207 = scalar_lea.vmem [#allocation8], %s206
        // Predicated region
        $region33: #{tpu_custom_call.1} parent=27 // pred_check
          %p208 = pneg %p97
        $region34: #{tpu_custom_call.1} parent=27 // pred_check_branch
          %210 = sbr.rel (%p208) target = $region36
        $region35: #{tpu_custom_call.1} parent=27 // pred_region
          %211 = dma.done %s204, 128
        $region36: #{tpu_custom_call.1} parent=27 // pred_fallthru
          _
        %s212 = sand.u32 %s54, 1
        %s213 = scalar_lea.sflag [#allocation6], %s212
        %s214 = sand.u32 %s54, 1
        %s215 = smul.addr %s214, 8
        %s216 = scalar_lea.vmem [#allocation5], %s215
        %p217 = pneg %p67
        %p218 = pneg %p64
        %s219 = sand.u32 %s84, 1
        %s220 = scalar_lea.sflag [#allocation9], %s219
        %s221 = sand.u32 %s84, 1
        %s222 = smul.addr %s221, 8
        %s223 = scalar_lea.vmem [#allocation8], %s222
        %p224 = pneg %p97
        %p225 = pneg %p94
        %p226 = pneg %p125
        %p227 = pneg %p122
        %s228 = sand.u32 %s112, 1
        %s229 = scalar_lea.sflag [#allocation7], %s228
        %s230 = sand.u32 %s112, 1
        %s231 = smul.addr %s230, 8
        %s232 = scalar_lea.vmem [#allocation10], %s231
        %s233 = sld [smem:[#allocation3 + %s36]]
        %s234 = sld [smem:[#allocation4 + %s36]]
        %v235 = vld [vmem:[%s198] sm:$0xff]
        %v236 = vstv %s234
        %v237 = vmul.f32 %v236, %v235
        %s238 = ssub.f32 1.0, %s234
        %v239 = vld [vmem:[%s207] sm:$0xff]
        %v240 = vstv %s238
        %v241 = vmul.f32 %v240, %v239
        %v242 = vadd.f32 %v237, %v241
        %243 = vst [vmem:[%s232] sm:$0xff] %v242
        %s244 = sand.u32 %s112, 1
        %s245 = scalar_lea.sflag [#allocation7], %s244
        %s246 = sand.u32 %s112, 1
        %s247 = smul.addr %s246, 8
        %s248 = scalar_lea.vmem [#allocation10], %s247
        // Predicated region
        $region37: #{tpu_custom_call.1} parent=27 // pred_check
          %p249 = pneg %p122
        $region38: #{tpu_custom_call.1} parent=27 // pred_check_branch
          %251 = sbr.rel (%p249) target = $region40
        $region39: #{tpu_custom_call.1} parent=27 // pred_region
          %s253 = ssub.s32 128, 128
          %254 = vsyncadd %s245, %s253
          %s255 = smul.addr %s37, 4
          %s256 = smul.addr %s36, 4
          %s257 = sadd.s32 %s255, %s256
          %s258 = smul.addr %s257, 32
          %s259 = scalar_lea.hbm %s4, %s258
          %s261 = sshll.u32 %s248, 4
          %s262 = int_to_ptr.vmem [resolvable:$true] %s261
          %264 = dma.vmem_to_hbm [thread:$0]  %s262, 128, %s259, %s245
        $region40: #{tpu_custom_call.1} parent=27 // pred_fallthru
          _
      $region28: #{tpu_custom_call.1} parent=5 // pred_fallthru
        _
      %p265 = scmp.le.s32.totalorder 2, %s27
      // Predicated region
      $region41: #{tpu_custom_call.1} parent=5 // pred_check
        %p266 = pneg %p265
      $region42: #{tpu_custom_call.1} parent=5 // pred_check_branch
        %268 = sbr.rel (%p266) target = $region44
      $region43: #{tpu_custom_call.1} parent=5 // pred_region
        %s269 = ssub.s32 %s27, 2
        // Predicated region
        $region45: #{tpu_custom_call.1} parent=43 // pred_check
          %p270 = pneg %p128
        $region46: #{tpu_custom_call.1} parent=43 // pred_check_branch
          %272 = sbr.rel (%p270) target = $region48
        $region47: #{tpu_custom_call.1} parent=43 // pred_region
          %s273 = sand.u32 %s113, 1
          %s274 = scalar_lea.sflag [#allocation7], %s273
          %s275 = sand.u32 %s113, 1
          %s276 = smul.addr %s275, 8
          %s277 = scalar_lea.vmem [#allocation10], %s276
          %278 = dma.done %s274, 128
        $region48: #{tpu_custom_call.1} parent=43 // pred_fallthru
          _
      $region44: #{tpu_custom_call.1} parent=5 // pred_fallthru
        _
    $region6: #{tpu_custom_call.1} parent=1 // loop_footer
      %s31 = sadd.s32 1, %s27
    $region7: #{tpu_custom_call.1} parent=1 // loop_footer_branch
      %26 = sbr.rel target = $region3
    $region8: #{tpu_custom_call.1} parent=1 // loop_exit
      _
    %279 = vsyncpa [#allocation6], 1
    %s280 = scalar_lea.sflag [#allocation6], 1
    %281 = vsyncpa %s280, 1
    %282 = vsyncpa [#allocation9], 1
    %s283 = scalar_lea.sflag [#allocation9], 1
    %284 = vsyncpa %s283, 1
    %285 = vsyncpa [#allocation7], 1
    %s286 = scalar_lea.sflag [#allocation7], 1
    %287 = vsyncpa %s286, 1

</llo_original>
